<compile_context>
chip_gen: v7x
topology: tpu7x:2x2x1
jax: 0.10.0
libtpu: 0.0.40
codegen_flags: <defaults>
</compile_context>

<pallas_src>
import functools

import jax
import jax.numpy as jnp
from jax.experimental import pallas as pl
from jax.experimental.pallas import tpu as pltpu


def _round_up(x, m):
    return ((x + m - 1) // m) * m


def _roi_kernel(mask_ref, feat_ref, w_ref, b_ref, out_ref, acc_ref, *, num_feat):
    """Grid: (box tiles [parallel], coord tiles [arbitrary/reduction])."""
    k = pl.program_id(1)

    @pl.when(k == 0)
    def _():
        acc_ref[...] = jnp.zeros_like(acc_ref)

    m = mask_ref[...]                      # [TB, TN]     bf16 {0,1}
    f = feat_ref[...]                      # [C+1, TN]    bf16 (last row = ones)
    # masked-select + per-box sum (and count via the ones channel) in a single
    # MXU pass: contract over the coord axis of both operands (A @ B^T).
    acc_ref[...] += jax.lax.dot_general(
        m, f, (((1,), (1,)), ((), ())),
        preferred_element_type=jnp.float32)          # [TB, C+1] f32

    @pl.when(k == pl.num_programs(1) - 1)
    def _():
        acc = acc_ref[...]
        sums = acc[:, :num_feat]                      # [TB, C]
        cnt = acc[:, num_feat:num_feat + 1]           # [TB, 1]
        pooled = sums * pl.reciprocal(jnp.maximum(cnt, 1.0), approx=False)
        out_ref[...] = (
            jnp.dot(pooled, w_ref[...], preferred_element_type=jnp.float32)
            + b_ref[...]
        ).astype(out_ref.dtype)


@functools.partial(jax.jit, static_argnames=("coord_tile", "box_tile"))
def sparse_roi_extra_cut(feature_map, is_inside, weight, bias,
                         *, coord_tile=4096, box_tile=256):
    """feature_map: [B,C,H,W]; is_inside: [num_boxes, B*H*W] bool.

    Returns box_features: [num_boxes, out_dim] float32.
    """
    assert coord_tile % 128 == 0 and box_tile % 16 == 0
    B, C, H, W = feature_map.shape
    HW = H * W
    N = B * HW
    NB = is_inside.shape[0]
    D = weight.shape[1]

    # Tile sizes (clamped to the padded problem size).
    TN = min(coord_tile, _round_up(N, 128))
    N_p = _round_up(N, TN)
    TB = min(box_tile, _round_up(NB, 16))
    NB_p = _round_up(NB, TB)

    # "extract": channel-major [C+1, N] point features with a fused ones
    # channel (the per-box point count rides the same MXU contraction).
    # Only major-dim reshapes/transposes (minor HW axis untouched), fused with
    # the bf16 cast by XLA -> one cheap HBM pass, no NHWC round trip.
    f = feature_map.reshape(B, C, HW)
    f = jnp.concatenate([f, jnp.ones((B, 1, HW), feature_map.dtype)], axis=1)
    f = jnp.transpose(f, (1, 0, 2)).reshape(C + 1, N).astype(jnp.bfloat16)
    if N_p != N:
        f = jnp.pad(f, ((0, 0), (0, N_p - N)))

    # Mask streamed as bf16 (exact for {0,1}); padded rows/cols are zeros and
    # contribute nothing to sum or count.
    m = is_inside.astype(jnp.bfloat16)
    if NB_p != NB or N_p != N:
        m = jnp.pad(m, ((0, NB_p - NB), (0, N_p - N)))

    w = weight.astype(jnp.float32)
    bias2d = bias.reshape(1, D).astype(jnp.float32)

    grid = (NB_p // TB, N_p // TN)
    kernel = functools.partial(_roi_kernel, num_feat=C)

    out = pl.pallas_call(
        kernel,
        out_shape=jax.ShapeDtypeStruct((NB_p, D), jnp.float32),
        grid_spec=pltpu.PrefetchScalarGridSpec(
            num_scalar_prefetch=0,
            grid=grid,
            in_specs=[
                pl.BlockSpec((TB, TN), lambda i, k: (i, k)),       # mask
                pl.BlockSpec((C + 1, TN), lambda i, k: (0, k)),    # feats+ones
                pl.BlockSpec((C, D), lambda i, k: (0, 0)),         # weight
                pl.BlockSpec((1, D), lambda i, k: (0, 0)),         # bias
            ],
            out_specs=pl.BlockSpec((TB, D), lambda i, k: (i, 0)),
            scratch_shapes=[
                pltpu.VMEM((TB, C + 1), jnp.float32),   # per-box sum + count
            ],
        ),
        compiler_params=pltpu.CompilerParams(
            dimension_semantics=("parallel", "arbitrary"),
            vmem_limit_bytes=32 * 1024 * 1024,
        ),
    )(m, f, w, bias2d)
    return out[:NB]


def _reference(feature_map, is_inside, weight, bias):
    B, C, H, W = feature_map.shape
    feats = jnp.transpose(feature_map, (0, 2, 3, 1)).reshape(B * H * W, C)
    m = is_inside.astype(jnp.float32)
    pooled = (m @ feats) / jnp.maximum(m.sum(axis=1, keepdims=True), 1.0)
    return pooled @ weight + bias.reshape(1, -1)


if __name__ == "__main__":
    key = jax.random.PRNGKey(0)
    k_feat, k_mask, k_w, k_b = jax.random.split(key, 4)

    B, C, H, W = 2, 4, 16, 16
    NUM_BOXES = 8
    OUT_DIM = 32
    N = B * H * W

    feature_map = jax.random.normal(k_feat, (B, C, H, W), dtype=jnp.float32)
    is_inside = jax.random.bernoulli(k_mask, p=0.25, shape=(NUM_BOXES, N))

    # Deterministic "combiner" parameters (linear head after mean pooling).
    weight = jax.random.normal(k_w, (C, OUT_DIM), dtype=jnp.float32) * 0.1
    bias = jax.random.normal(k_b, (OUT_DIM,), dtype=jnp.float32) * 0.01

    box_features = sparse_roi_extra_cut(feature_map, is_inside, weight, bias)
    box_features = jax.block_until_ready(box_features)

    expected = _reference(feature_map, is_inside, weight, bias)
    assert box_features.shape == (NUM_BOXES, OUT_DIM)
    # bf16-streamed inputs with f32 accumulation -> slightly looser tolerance.
    assert jnp.allclose(box_features, expected, atol=1e-2, rtol=1e-2)

    print("KERNEL_OK")
</pallas_src>

<mosaic_0001>
module attributes {stable_mosaic.version = 11 : i64} {
  func.func @_roi_kernel(%arg0: i32, %arg1: i32, %arg2: memref<16x512xbf16, #tpu.memory_space<vmem>>, %arg3: memref<5x512xbf16, #tpu.memory_space<vmem>>, %arg4: memref<4x32xf32, #tpu.memory_space<vmem>>, %arg5: memref<1x32xf32, #tpu.memory_space<vmem>>, %arg6: memref<16x32xf32, #tpu.memory_space<vmem>>, %arg7: memref<16x5xf32, #tpu.memory_space<vmem>>) attributes {dimension_semantics = [#tpu.dimension_semantics<parallel>, #tpu.dimension_semantics<arbitrary>], iteration_bounds = array<i64: 1, 1>, scalar_prefetch = 0 : i64, scratch_operands = 1 : i64, tpu.core_type = #tpu.core_type<tc>, window_params = [{transform_indices = @transform_0, window_bounds = array<i64: 16, 512>}, {transform_indices = @transform_1, window_bounds = array<i64: 5, 512>}, {pipeline_mode = #tpu.pipeline_mode<synchronous>, transform_indices = @transform_2, window_bounds = array<i64: 4, 32>}, {pipeline_mode = #tpu.pipeline_mode<synchronous>, transform_indices = @transform_3, window_bounds = array<i64: 1, 32>}, {transform_indices = @transform_4, window_bounds = array<i64: 16, 32>}]} {
    %c0_i32 = arith.constant 0 : i32
    %0 = arith.cmpi eq, %arg1, %c0_i32 : i32
    %1 = arith.extui %0 : i1 to i32
    %c0_i32_0 = arith.constant 0 : i32
    %2 = arith.cmpi ne, %1, %c0_i32_0 : i32
    scf.if %2 {
      %cst_10 = arith.constant 0.000000e+00 : f32
      %12 = vector.broadcast %cst_10 : f32 to vector<16x5xf32>
      %c0_11 = arith.constant 0 : index
      %c0_12 = arith.constant 0 : index
      %13 = vector.load %arg7[%c0_11, %c0_12] : memref<16x5xf32, #tpu.memory_space<vmem>>, vector<16x5xf32>
      tpu.vector_store %arg7[%c0_11, %c0_12], %12 {strides = array<i32>} : memref<16x5xf32, #tpu.memory_space<vmem>>, vector<16x5xf32>,
    } else {
    }
    %c0 = arith.constant 0 : index
    %c0_1 = arith.constant 0 : index
    %3 = vector.load %arg2[%c0, %c0_1] : memref<16x512xbf16, #tpu.memory_space<vmem>>, vector<16x512xbf16>
    %c0_2 = arith.constant 0 : index
    %c0_3 = arith.constant 0 : index
    %4 = vector.load %arg3[%c0_2, %c0_3] : memref<5x512xbf16, #tpu.memory_space<vmem>>, vector<5x512xbf16>
    %c0_4 = arith.constant 0 : index
    %c0_5 = arith.constant 0 : index
    %5 = vector.load %arg7[%c0_4, %c0_5] : memref<16x5xf32, #tpu.memory_space<vmem>>, vector<16x5xf32>
    %cst = arith.constant dense<0.000000e+00> : vector<16x5xf32>
    %6 = tpu.matmul %3, %4, %cst {dimension_numbers = #tpu.dot_dimension_numbers<[1], [1], [0], [0], [0, 0, 1, 0], [], []>} : vector<16x512xbf16>, vector<5x512xbf16>, vector<16x5xf32> -> vector<16x5xf32>
    %7 = arith.addf %5, %6 : vector<16x5xf32>
    %c0_6 = arith.constant 0 : index
    %c0_7 = arith.constant 0 : index
    %8 = vector.load %arg7[%c0_6, %c0_7] : memref<16x5xf32, #tpu.memory_space<vmem>>, vector<16x5xf32>
    tpu.vector_store %arg7[%c0_6, %c0_7], %7 {strides = array<i32>} : memref<16x5xf32, #tpu.memory_space<vmem>>, vector<16x5xf32>,
    %c0_i32_8 = arith.constant 0 : i32
    %9 = arith.cmpi eq, %arg1, %c0_i32_8 : i32
    %10 = arith.extui %9 : i1 to i32
    %c0_i32_9 = arith.constant 0 : i32
    %11 = arith.cmpi ne, %10, %c0_i32_9 : i32
    scf.if %11 {
      %c0_10 = arith.constant 0 : index
      %c0_11 = arith.constant 0 : index
      %12 = vector.load %arg7[%c0_10, %c0_11] : memref<16x5xf32, #tpu.memory_space<vmem>>, vector<16x5xf32>
      %13 = vector.extract_strided_slice %12 {offsets = [0, 0], sizes = [16, 4], strides = [1, 1]} : vector<16x5xf32> to vector<16x4xf32>
      %14 = vector.extract_strided_slice %12 {offsets = [0, 4], sizes = [16, 1], strides = [1, 1]} : vector<16x5xf32> to vector<16x1xf32>
      %cst_12 = arith.constant 1.000000e+00 : f32
      %15 = vector.broadcast %cst_12 : f32 to vector<16x1xf32>
      %16 = arith.maximumf %14, %15 : vector<16x1xf32>
      %17 = tpu.reciprocal %16 : vector<16x1xf32> -> vector<16x1xf32>
      %18 = vector.broadcast %17 : vector<16x1xf32> to vector<16x4xf32>
      %19 = arith.mulf %13, %18 : vector<16x4xf32>
      %c0_13 = arith.constant 0 : index
      %c0_14 = arith.constant 0 : index
      %20 = vector.load %arg4[%c0_13, %c0_14] : memref<4x32xf32, #tpu.memory_space<vmem>>, vector<4x32xf32>
      %cst_15 = arith.constant dense<0.000000e+00> : vector<16x32xf32>
      %21 = tpu.matmul %19, %20, %cst_15 {dimension_numbers = #tpu.dot_dimension_numbers<[1], [0], [0], [1], [0, 0, 1, 1], [], []>} : vector<16x4xf32>, vector<4x32xf32>, vector<16x32xf32> -> vector<16x32xf32>
      %c0_16 = arith.constant 0 : index
      %c0_17 = arith.constant 0 : index
      %22 = vector.load %arg5[%c0_16, %c0_17] : memref<1x32xf32, #tpu.memory_space<vmem>>, vector<1x32xf32>
      %23 = vector.broadcast %22 : vector<1x32xf32> to vector<16x32xf32>
      %24 = arith.addf %21, %23 : vector<16x32xf32>
      %c0_18 = arith.constant 0 : index
      %c0_19 = arith.constant 0 : index
      %25 = vector.load %arg6[%c0_18, %c0_19] : memref<16x32xf32, #tpu.memory_space<vmem>>, vector<16x32xf32>
      tpu.vector_store %arg6[%c0_18, %c0_19], %24 {strides = array<i32>} : memref<16x32xf32, #tpu.memory_space<vmem>>, vector<16x32xf32>,
    } else {
    }
    return
  }
  func.func @transform_0(%arg0: i32, %arg1: i32) -> (i32, i32) {
    %c0_i32 = arith.constant 0 : i32
    return %arg0, %arg1 : i32, i32
  }
  func.func @transform_1(%arg0: i32, %arg1: i32) -> (i32, i32) {
    %c0_i32 = arith.constant 0 : i32
    %c0_i32_0 = arith.constant 0 : i32
    return %c0_i32, %arg1 : i32, i32
  }
  func.func @transform_2(%arg0: i32, %arg1: i32) -> (i32, i32) {
    %c0_i32 = arith.constant 0 : i32
    %c0_i32_0 = arith.constant 0 : i32
    %c0_i32_1 = arith.constant 0 : i32
    return %c0_i32, %c0_i32_0 : i32, i32
  }
  func.func @transform_3(%arg0: i32, %arg1: i32) -> (i32, i32) {
    %c0_i32 = arith.constant 0 : i32
    %c0_i32_0 = arith.constant 0 : i32
    %c0_i32_1 = arith.constant 0 : i32
    return %c0_i32, %c0_i32_0 : i32, i32
  }
  func.func @transform_4(%arg0: i32, %arg1: i32) -> (i32, i32) {
    %c0_i32 = arith.constant 0 : i32
    %c0_i32_0 = arith.constant 0 : i32
    return %arg0, %c0_i32 : i32, i32
  }
}

</mosaic_0001>

<llo_original>
// kernel: sparse_roi_extra_cut.1
$region0: #{sparse_roi_extra_cut.1}
  #allocation0 [shape = 'u32[]', space=smem, size = 0x4, offset = 0x4, fixed_abs, tag = 'smem constant byte address 0x4 - core index']
  #allocation1 [shape = 'u32[144,128]{1,0:T(1,128)}', space=vmem, size = 0x12000, scoped, tag = 'internal scratch']
  #allocation2 [shape = 'f32[16,5]{1,0:T(8,128)}', space=vmem, size = 0x2000, scoped, tag = 'scratch operand']
  %s0 = inlined_call_operand.vmem [shape: bf16[16,512], index: 0, kind: input, shape index: {}]
  %s1 = inlined_call_operand.vmem [shape: bf16[5,512], index: 1, kind: input, shape index: {}]
  %s2 = inlined_call_operand.vmem [shape: f32[4,32], index: 2, kind: input, shape index: {}]
  %s3 = inlined_call_operand.vmem [shape: f32[1,32], index: 3, kind: input, shape index: {}]
  %s4 = inlined_call_operand.vmem [shape: f32[16,32], index: 4, kind: output, shape index: {}]
  %s5 = sld [smem:[#allocation0]]
  $region34: #{sparse_roi_extra_cut.1} parent=0
    _
  %s7 = ssub.s32 1, %s5
  %s8 = scalar_select 0, %s7, %s5
  // Predicated region
  $region2: #{sparse_roi_extra_cut.1} parent=0 // pred_check
    _
  $region3: #{sparse_roi_extra_cut.1} parent=0 // pred_check_branch
    %10 = sbr.rel (0) target = $region5
  $region4: #{sparse_roi_extra_cut.1} parent=0 // pred_region
    _
  $region5: #{sparse_roi_extra_cut.1} parent=0 // pred_fallthru
    _
  // Predicated region
  $region6: #{sparse_roi_extra_cut.1} parent=0 // pred_check
    _
  $region7: #{sparse_roi_extra_cut.1} parent=0 // pred_check_branch
    %12 = sbr.rel (0) target = $region9
  $region8: #{sparse_roi_extra_cut.1} parent=0 // pred_region
    _
  $region9: #{sparse_roi_extra_cut.1} parent=0 // pred_fallthru
    _
  // Predicated region
  $region10: #{sparse_roi_extra_cut.1} parent=0 // pred_check
    _
  $region11: #{sparse_roi_extra_cut.1} parent=0 // pred_check_branch
    %14 = sbr.rel (0) target = $region13
  $region12: #{sparse_roi_extra_cut.1} parent=0 // pred_region
    _
  $region13: #{sparse_roi_extra_cut.1} parent=0 // pred_fallthru
    _
  // Predicated region
  $region14: #{sparse_roi_extra_cut.1} parent=0 // pred_check
    _
  $region15: #{sparse_roi_extra_cut.1} parent=0 // pred_check_branch
    %16 = sbr.rel (0) target = $region17
  $region16: #{sparse_roi_extra_cut.1} parent=0 // pred_region
    _
  $region17: #{sparse_roi_extra_cut.1} parent=0 // pred_fallthru
    _
  %p18 = scmp.eq.s32.totalorder 0, 0
  // Predicated region
  $region18: #{sparse_roi_extra_cut.1} parent=0 // pred_check
    %p19 = pneg %p18
  $region19: #{sparse_roi_extra_cut.1} parent=0 // pred_check_branch
    %21 = sbr.rel (%p19) target = $region21
  $region20: #{sparse_roi_extra_cut.1} parent=0 // pred_region
    %vm22 = vcmask 39936
    %23 = vst.msk [vmem:[#allocation2] sm:$0xff] %vm22, 0.0
    %24 = vst.msk [vmem:[#allocation2 + $0x8] sm:$0xff] %vm22, 0.0
  $region21: #{sparse_roi_extra_cut.1} parent=0 // pred_fallthru
    _
  %v25 = vld [vmem:[%s0] sm:$0xff]
  %v26 = vld [vmem:[%s0 + $0x8] sm:$0xff]
  %v27 = vld [vmem:[%s0 + $0x10] sm:$0xff]
  %v28 = vld [vmem:[%s0 + $0x18] sm:$0xff]
  %v29 = vld [vmem:[%s1] sm:$0x77]
  %v30 = vld [vmem:[%s1 + $0x8] sm:$0x77]
  %v31 = vld [vmem:[#allocation2] sm:$0xff]
  %v32 = vld [vmem:[#allocation2 + $0x8] sm:$0xff]
  %v37 = vunpack.c.l.b16 %v25
  %v38 = vunpack.c.h.b16 %v25
  %v39 = vunpack.c.l.b16 %v26
  %v40 = vunpack.c.h.b16 %v26
  %v41 = vunpack.c.l.b16 %v27
  %v42 = vunpack.c.h.b16 %v27
  %v43 = vunpack.c.l.b16 %v28
  %v44 = vunpack.c.h.b16 %v28
  %v45 = vpack.c.b16 %v41, %v37
  %v46 = vpack.c.b16 %v42, %v38
  %v47 = vpack.c.b16 %v43, %v39
  %v48 = vpack.c.b16 %v44, %v40
  %v55 = vunpack.c.l.b16 %v29
  %v56 = vunpack.c.h.b16 %v29
  %v57 = vunpack.c.l.b16 %v30
  %v58 = vunpack.c.h.b16 %v30
  %v59 = vpack.c.b16 %v55, %v55
  %v60 = vpack.c.b16 %v56, %v56
  %v61 = vpack.c.b16 %v57, %v57
  %v62 = vpack.c.b16 %v58, %v58
  %67 = vmatprep.subr.bf16.mxu0 %v60
  %68 = vmatpush1.bf16.xpose.msra.mxu0 %v59
  %69 = vmatprep.subr.bf16.mxu0 0
  %70 = vmatpush1.bf16.xpose.msra.mxu0 0
  %71 = vmatprep.subr.bf16.mxu0 0
  %72 = vmatpush1.bf16.xpose.msra.mxu0 0
  %73 = vmatprep.subr.bf16.mxu0 0
  %74 = vmatpush1.bf16.xpose.msra.mxu0 0
  %75 = vmatprep.subr.bf16.mxu0 0
  %76 = vmatpush1.bf16.xpose.msra.mxu0 0
  %77 = vmatprep.subr.bf16.mxu0 0
  %78 = vmatpush1.bf16.xpose.msra.mxu0 0
  %79 = vmatprep.subr.bf16.mxu0 0
  %80 = vmatpush1.bf16.xpose.msra.mxu0 0
  %81 = vmatprep.subr.bf16.mxu0 0
  %82 = vmatpush1.bf16.xpose.msra.mxu0 0
  %83 = vmatprep.subr.bf16.mxu0 0
  %84 = vmatpush1.bf16.xpose.msra.mxu0 0
  %85 = vmatprep.subr.bf16.mxu0 0
  %86 = vmatpush1.bf16.xpose.msra.mxu0 0
  %87 = vmatprep.subr.bf16.mxu0 0
  %88 = vmatpush1.bf16.xpose.msra.mxu0 0
  %89 = vmatprep.subr.bf16.mxu0 0
  %90 = vmatpush1.bf16.xpose.msra.mxu0 0
  %91 = vmatprep.subr.bf16.mxu0 0
  %92 = vmatpush1.bf16.xpose.msra.mxu0 0
  %93 = vmatprep.subr.bf16.mxu0 0
  %94 = vmatpush1.bf16.xpose.msra.mxu0 0
  %95 = vmatprep.subr.bf16.mxu0 0
  %96 = vmatpush1.bf16.xpose.msra.mxu0 0
  %97 = vmatprep.subr.bf16.mxu0 0
  %98 = vmatpush1.bf16.xpose.msra.mxu0 0
  %99 = vmatprep.mubr.bf16.mxu0 %v46
  %100 = vmatmul.mubr.bf16.gmra.mrb[0].mxu0 %v45
  %v101 = vpop.f32.mrb[0].mxu0
  %v102 = vadd.f32 0.0, %v101
  %v103 = vpop.f32.mrb[0].mxu0
  %v104 = vpop.f32.mrb[0].mxu0
  %v105 = vadd.f32 0.0, %v104
  %v106 = vpop.f32.mrb[0].mxu0
  %107 = vdwg.mxu0
  %108 = vmatprep.subr.bf16.mxu0 %v62
  %109 = vmatpush1.bf16.xpose.msra.mxu0 %v61
  %110 = vmatprep.subr.bf16.mxu0 0
  %111 = vmatpush1.bf16.xpose.msra.mxu0 0
  %112 = vmatprep.subr.bf16.mxu0 0
  %113 = vmatpush1.bf16.xpose.msra.mxu0 0
  %114 = vmatprep.subr.bf16.mxu0 0
  %115 = vmatpush1.bf16.xpose.msra.mxu0 0
  %116 = vmatprep.subr.bf16.mxu0 0
  %117 = vmatpush1.bf16.xpose.msra.mxu0 0
  %118 = vmatprep.subr.bf16.mxu0 0
  %119 = vmatpush1.bf16.xpose.msra.mxu0 0
  %120 = vmatprep.subr.bf16.mxu0 0
  %121 = vmatpush1.bf16.xpose.msra.mxu0 0
  %122 = vmatprep.subr.bf16.mxu0 0
  %123 = vmatpush1.bf16.xpose.msra.mxu0 0
  %124 = vmatprep.subr.bf16.mxu0 0
  %125 = vmatpush1.bf16.xpose.msra.mxu0 0
  %126 = vmatprep.subr.bf16.mxu0 0
  %127 = vmatpush1.bf16.xpose.msra.mxu0 0
  %128 = vmatprep.subr.bf16.mxu0 0
  %129 = vmatpush1.bf16.xpose.msra.mxu0 0
  %130 = vmatprep.subr.bf16.mxu0 0
  %131 = vmatpush1.bf16.xpose.msra.mxu0 0
  %132 = vmatprep.subr.bf16.mxu0 0
  %133 = vmatpush1.bf16.xpose.msra.mxu0 0
  %134 = vmatprep.subr.bf16.mxu0 0
  %135 = vmatpush1.bf16.xpose.msra.mxu0 0
  %136 = vmatprep.subr.bf16.mxu0 0
  %137 = vmatpush1.bf16.xpose.msra.mxu0 0
  %138 = vmatprep.subr.bf16.mxu0 0
  %139 = vmatpush1.bf16.xpose.msra.mxu0 0
  %140 = vmatprep.mubr.bf16.mxu0 %v48
  %141 = vmatmul.mubr.bf16.gmra.mrb[0].mxu0 %v47
  %v142 = vpop.f32.mrb[0].mxu0
  %v143 = vadd.f32 %v102, %v142
  %v144 = vpop.f32.mrb[0].mxu0
  %v145 = vpop.f32.mrb[0].mxu0
  %v146 = vadd.f32 %v105, %v145
  %v147 = vpop.f32.mrb[0].mxu0
  %148 = vdwg.mxu0
  %v149 = vadd.f32 %v31, %v143
  %v150 = vadd.f32 %v32, %v146
  %vm151 = vcmask 39936
  %152 = vst.msk [vmem:[#allocation2] sm:$0xff] %vm151, %v149
  %153 = vst.msk [vmem:[#allocation2 + $0x8] sm:$0xff] %vm151, %v150
  // Predicated region
  $region22: #{sparse_roi_extra_cut.1} parent=0 // pred_check
    %p154 = pneg %p18
  $region23: #{sparse_roi_extra_cut.1} parent=0 // pred_check_branch
    %156 = sbr.rel (%p154) target = $region25
  $region24: #{sparse_roi_extra_cut.1} parent=0 // pred_region
    %v157 = vld [vmem:[#allocation2] sm:$0xff]
    %v158 = vld [vmem:[#allocation2 + $0x8] sm:$0xff]
    %v159 = vmax.f32 %v157, 1.0
    %v160 = vmax.f32 %v158, 1.0
    %v161 = vrcp.pop %v159
    %v162 = vrcp.pop %v160
    %164 = vset.pattern.permute.xlu0 4
    %165 = vperm.xlu0 %164, %v161
    %v166 = vpop.permute.xlu0 %165
    %169 = vset.pattern.permute.xlu0 4
    %170 = vperm.xlu0 %169, %v162
    %v171 = vpop.permute.xlu0 %170
    %v173 = vmul.f32 %v157, %v166
    %v174 = vmul.f32 %v158, %v171
    %v175 = vld [vmem:[%s2] sm:$0xf]
    %v176 = vld [vmem:[%s3] sm:$0x1]
    %v178 = vlaneseq
    %v179 = vshrl.u32 %v178, 7
    %v180 = vsub.s32 0, %v179
    %v181 = vrot.slane %v176, %v180
    %vm183 = vcmask 31744
    %v185 = vsel %vm183, %v173, 0
    %v188 = vsel %vm183, %v174, 0
    %vm190 = vcmask 1043456
    %v192 = vsel %vm190, %v175, 0
    %194 = vmatprep.subr.mxu0 0.0
    %195 = vmatpush1.msra.mxu0 %v192
    %196 = vmatprep.subr.mxu0 0.0
    %197 = vmatpush1.msra.mxu0 0.0
    %198 = vmatprep.subr.mxu0 0.0
    %199 = vmatpush1.msra.mxu0 0.0
    %200 = vmatprep.subr.mxu0 0.0
    %201 = vmatpush1.msra.mxu0 0.0
    %202 = vmatprep.subr.mxu0 0.0
    %203 = vmatpush1.msra.mxu0 0.0
    %204 = vmatprep.subr.mxu0 0.0
    %205 = vmatpush1.msra.mxu0 0.0
    %206 = vmatprep.subr.mxu0 0.0
    %207 = vmatpush1.msra.mxu0 0.0
    %208 = vmatprep.subr.mxu0 0.0
    %209 = vmatpush1.msra.mxu0 0.0
    %210 = vmatprep.subr.mxu0 0.0
    %211 = vmatpush1.msra.mxu0 0.0
    %212 = vmatprep.subr.mxu0 0.0
    %213 = vmatpush1.msra.mxu0 0.0
    %214 = vmatprep.subr.mxu0 0.0
    %215 = vmatpush1.msra.mxu0 0.0
    %216 = vmatprep.subr.mxu0 0.0
    %217 = vmatpush1.msra.mxu0 0.0
    %218 = vmatprep.subr.mxu0 0.0
    %219 = vmatpush1.msra.mxu0 0.0
    %220 = vmatprep.subr.mxu0 0.0
    %221 = vmatpush1.msra.mxu0 0.0
    %222 = vmatprep.subr.mxu0 0.0
    %223 = vmatpush1.msra.mxu0 0.0
    %224 = vmatprep.subr.mxu0 0.0
    %225 = vmatpush1.msra.mxu0 0.0
    %226 = vmatprep.subr.mxu0 0.0
    %227 = vmatpush1.msra.mxu0 0.0
    %228 = vmatprep.subr.mxu0 0.0
    %229 = vmatpush1.msra.mxu0 0.0
    %230 = vmatprep.subr.mxu0 0.0
    %231 = vmatpush1.msra.mxu0 0.0
    %232 = vmatprep.subr.mxu0 0.0
    %233 = vmatpush1.msra.mxu0 0.0
    %234 = vmatprep.subr.mxu0 0.0
    %235 = vmatpush1.msra.mxu0 0.0
    %236 = vmatprep.subr.mxu0 0.0
    %237 = vmatpush1.msra.mxu0 0.0
    %238 = vmatprep.subr.mxu0 0.0
    %239 = vmatpush1.msra.mxu0 0.0
    %240 = vmatprep.subr.mxu0 0.0
    %241 = vmatpush1.msra.mxu0 0.0
    %242 = vmatprep.subr.mxu0 0.0
    %243 = vmatpush1.msra.mxu0 0.0
    %244 = vmatprep.subr.mxu0 0.0
    %245 = vmatpush1.msra.mxu0 0.0
    %246 = vmatprep.subr.mxu0 0.0
    %247 = vmatpush1.msra.mxu0 0.0
    %248 = vmatprep.subr.mxu0 0.0
    %249 = vmatpush1.msra.mxu0 0.0
    %250 = vmatprep.subr.mxu0 0.0
    %251 = vmatpush1.msra.mxu0 0.0
    %252 = vmatprep.subr.mxu0 0.0
    %253 = vmatpush1.msra.mxu0 0.0
    %254 = vmatprep.subr.mxu0 0.0
    %255 = vmatpush1.msra.mxu0 0.0
    %256 = vmatprep.subr.mxu0 0.0
    %257 = vmatpush1.msra.mxu0 0.0
    %258 = vmatprep.mubr.f32.mxu0 0.0
    %259 = vmatmul.mubr.f32.gmra.mrb[0].mxu0 %v185
    %v260 = vpop.f32.mrb[0].mxu0
    %v261 = vadd.f32 %v181, %v260
    %v262 = vpop.f32.mrb[0].mxu0
    %263 = vmatprep.mubr.f32.mxu0 0.0
    %264 = vmatmul.mubr.f32.gmra.mrb[0].mxu0 %v188
    %v265 = vpop.f32.mrb[0].mxu0
    %v266 = vadd.f32 %v181, %v265
    %v267 = vpop.f32.mrb[0].mxu0
    %268 = vdwg.mxu0
    %vm269 = vcmask 261120
    %270 = vst.msk [vmem:[%s4] sm:$0xff] %vm269, %v261
    %271 = vst.msk [vmem:[%s4 + $0x8] sm:$0xff] %vm269, %v266
  $region25: #{sparse_roi_extra_cut.1} parent=0 // pred_fallthru
    _
  // Predicated region
  $region26: #{sparse_roi_extra_cut.1} parent=0 // pred_check
    _
  $region27: #{sparse_roi_extra_cut.1} parent=0 // pred_check_branch
    %273 = sbr.rel (0) target = $region29
  $region28: #{sparse_roi_extra_cut.1} parent=0 // pred_region
    _
  $region29: #{sparse_roi_extra_cut.1} parent=0 // pred_fallthru
    _
  // Predicated region
  $region30: #{sparse_roi_extra_cut.1} parent=0 // pred_check
    _
  $region31: #{sparse_roi_extra_cut.1} parent=0 // pred_check_branch
    %275 = sbr.rel (0) target = $region33
  $region32: #{sparse_roi_extra_cut.1} parent=0 // pred_region
    _
  $region33: #{sparse_roi_extra_cut.1} parent=0 // pred_fallthru
    _

</llo_original>
